<compile_context>
chip_gen: v7x
topology: tpu7x:2x2x1
jax: 0.10.0
libtpu: 0.0.40
codegen_flags: <defaults>
</compile_context>

<pallas_src>
import functools

import jax
import jax.numpy as jnp
from jax import lax
from jax.experimental import pallas as pl
from jax.experimental.pallas import tpu as pltpu


def _getitem_kernel(preds_ref, labels_ref, out_ref, *, block_rows, n_rows):
    x = preds_ref[...]                      # (TN, C), native dtype (no f32 cast)
    labels = labels_ref[...]                # (TN, 1) int32

    # argmax over dim=1 with first-max tie-breaking (matches torch.argmax).
    # Exact x == xmax compare is safe: xmax is the max of this same array.
    xmax = jnp.max(x, axis=1, keepdims=True)                     # (TN, 1)  XLU
    col = lax.broadcasted_iota(jnp.int32, x.shape, 1)            # (TN, C)
    sentinel = jnp.int32(x.shape[1])                             # > any valid idx
    idx = jnp.min(jnp.where(x == xmax, col, sentinel),
                  axis=1, keepdims=True)                         # (TN, 1)  XLU

    # Mask padded rows of a ragged last block (their data is undefined).
    row = (pl.program_id(0) * block_rows
           + lax.broadcasted_iota(jnp.int32, (block_rows, 1), 0))  # (TN, 1)
    valid = row < n_rows

    correct = ((idx == labels) & valid).astype(jnp.int32)
    out_ref[0, 0] = jnp.sum(correct)        # per-block partial count (SMEM)


def _pick_block_rows(n, c, itemsize):
    """Lane-dense (TN, C) tile: ~4 MiB per buffer (double-buffered ~8 MiB,
    safe under the 32 MiB scoped-VMEM default on v5e/v6e/v7x)."""
    target_bytes = 4 << 20
    rows = target_bytes // max(1, c * itemsize)
    rows = max(8, min(1024, (rows // 8) * 8))   # multiple of 8 (sublane rule)
    if n <= rows:
        return n            # full-extent block: always layout-legal
    return rows             # ragged last block handled by in-kernel masking


def get_item(preds, labels, *, block_rows=None):
    """preds: (N, C) float, labels: (N,) int. Returns 0-d int32 count.

    torch's .item() yields a Python scalar; under jit we return the 0-d array
    (call int(...) on it outside jit to match exactly).
    """
    n, c = preds.shape
    itemsize = jnp.dtype(preds.dtype).itemsize
    labels2d = labels.astype(jnp.int32).reshape(n, 1)

    if block_rows is None:
        block_rows = _pick_block_rows(n, c, itemsize)
    tn = min(block_rows, n)
    num_blocks = pl.cdiv(n, tn)

    kernel = functools.partial(_getitem_kernel, block_rows=tn, n_rows=n)

    cost = pl.CostEstimate(
        flops=3 * n * c,                 # max + compare + select, roughly
        transcendentals=0,               # softmax removed (argmax-equivalent)
        bytes_accessed=n * c * itemsize + n * 4 + num_blocks * 4,
    )

    partials = pl.pallas_call(
        kernel,
        grid=(num_blocks,),
        out_shape=jax.ShapeDtypeStruct((num_blocks, 1), jnp.int32),
        in_specs=[
            pl.BlockSpec((tn, c), lambda i: (i, 0)),
            pl.BlockSpec((tn, 1), lambda i: (i, 0)),
        ],
        out_specs=pl.BlockSpec((1, 1), lambda i: (i, 0),
                               memory_space=pltpu.MemorySpace.SMEM),
        compiler_params=pltpu.CompilerParams(
            dimension_semantics=("parallel",),   # shards blocks on v7x's 2 TCs
            vmem_limit_bytes=64 << 20,
        ),
        cost_estimate=cost,
    )(preds, labels2d)

    return jnp.sum(partials)


if __name__ == "__main__":
    key = jax.random.PRNGKey(0)
    k1, k2, k3, k4 = jax.random.split(key, 4)

    # Small shapes consistent with the module: batch=8, classes=32.
    N, C = 8, 32
    preds = jax.random.normal(k1, (N, C), dtype=jnp.float32)
    labels = jax.random.randint(k2, (N,), 0, C, dtype=jnp.int32)

    result = get_item(preds, labels)
    jax.block_until_ready(result)
    ref = jnp.sum(
        jnp.argmax(jax.nn.softmax(preds, axis=1), axis=1) == labels
    ).astype(jnp.int32)
    assert int(result) == int(ref), (int(result), int(ref))

    # Exercise the multi-block + ragged-tail path (5 blocks of 8 rows, 37 valid).
    N2, C2 = 37, 32
    preds2 = jax.random.normal(k3, (N2, C2), dtype=jnp.float32)
    labels2 = jax.random.randint(k4, (N2,), 0, C2, dtype=jnp.int32)
    result2 = get_item(preds2, labels2, block_rows=8)
    jax.block_until_ready(result2)
    ref2 = jnp.sum(
        jnp.argmax(jax.nn.softmax(preds2, axis=1), axis=1) == labels2
    ).astype(jnp.int32)
    assert int(result2) == int(ref2), (int(result2), int(ref2))

    print("KERNEL_OK")
</pallas_src>

<mosaic_0001>
module attributes {stable_mosaic.version = 11 : i64} {
  func.func @_getitem_kernel(%arg0: i32, %arg1: memref<8x32xf32, #tpu.memory_space<vmem>>, %arg2: memref<8x1xi32, #tpu.memory_space<vmem>>, %arg3: memref<1x1xi32, #tpu.memory_space<smem>>) attributes {dimension_semantics = [#tpu.dimension_semantics<parallel>], iteration_bounds = array<i64: 1>, scalar_prefetch = 0 : i64, scratch_operands = 0 : i64, tpu.core_type = #tpu.core_type<tc>, window_params = [{transform_indices = @transform_0, window_bounds = array<i64: 8, 32>}, {transform_indices = @transform_1, window_bounds = array<i64: 8, 1>}, {transform_indices = @transform_2, window_bounds = array<i64: 1, 1>}]} {
    %c0 = arith.constant 0 : index
    %c0_0 = arith.constant 0 : index
    %0 = vector.load %arg1[%c0, %c0_0] : memref<8x32xf32, #tpu.memory_space<vmem>>, vector<8x32xf32>
    %c0_1 = arith.constant 0 : index
    %c0_2 = arith.constant 0 : index
    %1 = vector.load %arg2[%c0_1, %c0_2] : memref<8x1xi32, #tpu.memory_space<vmem>>, vector<8x1xi32>
    %cst = arith.constant dense<0xFF800000> : vector<8xf32>
    %2 = vector.multi_reduction <maximumf>, %0, %cst [1] : vector<8x32xf32> to vector<8xf32>
    %3 = vector.shape_cast %2 : vector<8xf32> to vector<8x1xf32>
    %4 = tpu.iota {dimensions = array<i32: 1>} : vector<8x32xi32>
    %5 = vector.broadcast %3 : vector<8x1xf32> to vector<8x32xf32>
    %6 = arith.cmpf oeq, %0, %5 : vector<8x32xf32>
    %c32_i32 = arith.constant 32 : i32
    %7 = vector.broadcast %c32_i32 : i32 to vector<8x32xi32>
    %8 = arith.select %6, %4, %7 : vector<8x32xi1>, vector<8x32xi32>
    %cst_3 = arith.constant dense<2147483647> : vector<8xi32>
    %9 = vector.multi_reduction <minsi>, %8, %cst_3 [1] : vector<8x32xi32> to vector<8xi32>
    %10 = vector.shape_cast %9 : vector<8xi32> to vector<8x1xi32>
    %c8_i32 = arith.constant 8 : i32
    %11 = arith.muli %arg0, %c8_i32 : i32
    %12 = tpu.iota {dimensions = array<i32: 0>} : vector<8x1xi32>
    %13 = vector.broadcast %11 : i32 to vector<8x1xi32>
    %14 = arith.addi %13, %12 : vector<8x1xi32>
    %c8_i32_4 = arith.constant 8 : i32
    %15 = vector.broadcast %c8_i32_4 : i32 to vector<8x1xi32>
    %16 = arith.cmpi slt, %14, %15 : vector<8x1xi32>
    %17 = arith.cmpi eq, %10, %1 : vector<8x1xi32>
    %18 = arith.andi %17, %16 : vector<8x1xi1>
    %19 = arith.extui %18 : vector<8x1xi1> to vector<8x1xi32>
    %20 = vector.shape_cast %19 : vector<8x1xi32> to vector<1x8x1xi32>
    %cst_5 = arith.constant dense<0> : vector<1xi32>
    %21 = vector.multi_reduction <add>, %20, %cst_5 [1, 2] : vector<1x8x1xi32> to vector<1xi32>
    %22 = vector.shape_cast %21 : vector<1xi32> to vector<1x1x1xi32>
    %23 = vector.extract %22[0, 0, 0] : i32 from vector<1x1x1xi32>
    %c0_6 = arith.constant 0 : index
    %c0_7 = arith.constant 0 : index
    %24 = memref.load %arg3[%c0_6, %c0_7] : memref<1x1xi32, #tpu.memory_space<smem>>
    memref.store %23, %arg3[%c0_6, %c0_7] : memref<1x1xi32, #tpu.memory_space<smem>>
    return
  }
  func.func @transform_0(%arg0: i32) -> (i32, i32) {
    %c0_i32 = arith.constant 0 : i32
    %c0_i32_0 = arith.constant 0 : i32
    return %arg0, %c0_i32 : i32, i32
  }
  func.func @transform_1(%arg0: i32) -> (i32, i32) {
    %c0_i32 = arith.constant 0 : i32
    %c0_i32_0 = arith.constant 0 : i32
    return %arg0, %c0_i32 : i32, i32
  }
  func.func @transform_2(%arg0: i32) -> (i32, i32) {
    %c0_i32 = arith.constant 0 : i32
    %c0_i32_0 = arith.constant 0 : i32
    return %arg0, %c0_i32 : i32, i32
  }
}

</mosaic_0001>

<llo_original>
// kernel: tpu_custom_call.1
$region0: #{tpu_custom_call.1}
  #allocation0 [shape = 'u32[]', space=smem, size = 0x4, offset = 0x4, fixed_abs, tag = 'smem constant byte address 0x4 - core index']
  #allocation1 [shape = 'u32[144,128]{1,0:T(1,128)}', space=vmem, size = 0x12000, scoped, tag = 'internal scratch']
  %s0 = inlined_call_operand.hbm [shape: f32[8,32], index: 0, kind: input, shape index: {}]
  %s1 = inlined_call_operand.hbm [shape: s32[8,1], index: 1, kind: input, shape index: {}]
  %s2 = inlined_call_operand.hbm [shape: s32[1,1], index: 2, kind: output, shape index: {}]
  %s3 = sld [smem:[#allocation0]]
  $region26: #{tpu_custom_call.1} parent=0
    _
  %s5 = ssub.s32 1, %s3
  %s6 = scalar_select 0, %s5, %s3
  $region1: #{tpu_custom_call.1} parent=0
    #allocation2 [shape = 'u8[4096]{0}', space=vmem, size = 0x1000, scoped, tag = 'input window, operand 0, single buffered']
    #allocation3 [shape = 's32[1]{0}', space=sflag, size = 0x4, scoped, tag = 'scoped memory for tpu_custom_call.1']
    #allocation4 [shape = 's32[1]{0}', space=sflag, size = 0x4, scoped, tag = 'scoped memory for tpu_custom_call.1']
    #allocation5 [shape = 'u8[4096]{0}', space=vmem, size = 0x1000, scoped, tag = 'input window, operand 1, single buffered']
    #allocation6 [shape = 's32[1]{0}', space=sflag, size = 0x4, scoped, tag = 'scoped memory for tpu_custom_call.1']
    #allocation7 [shape = 'u8[512]{0}', space=smem, size = 0x200, scoped, tag = 'output window, operand 0, single buffered']
    %7 = vsyncpa [#allocation3], 0
    %8 = vsyncpa [#allocation6], 0
    %9 = vsyncpa [#allocation4], 0
    // Predicated region
    $region2: #{tpu_custom_call.1} parent=1 // pred_check
      _
    $region3: #{tpu_custom_call.1} parent=1 // pred_check_branch
      %11 = sbr.rel (0) target = $region5
    $region4: #{tpu_custom_call.1} parent=1 // pred_region
      %s13 = ssub.s32 128, 128
      %14 = vsyncadd [#allocation3], %s13
      %s16 = sshll.u32 [#allocation2], 4
      %s17 = int_to_ptr.vmem [resolvable:$true] %s16
      %19 = dma.hbm_to_vmem [thread:$0]  %s0, 128, %s17, [#allocation3]
    $region5: #{tpu_custom_call.1} parent=1 // pred_fallthru
      _
    // Predicated region
    $region6: #{tpu_custom_call.1} parent=1 // pred_check
      _
    $region7: #{tpu_custom_call.1} parent=1 // pred_check_branch
      %21 = sbr.rel (0) target = $region9
    $region8: #{tpu_custom_call.1} parent=1 // pred_region
      %s23 = ssub.s32 128, 128
      %24 = vsyncadd [#allocation6], %s23
      %s26 = sshll.u32 [#allocation5], 4
      %s27 = int_to_ptr.vmem [resolvable:$true] %s26
      %29 = dma.hbm_to_vmem [thread:$0]  %s1, 128, %s27, [#allocation6]
    $region9: #{tpu_custom_call.1} parent=1 // pred_fallthru
      _
    // Predicated region
    $region10: #{tpu_custom_call.1} parent=1 // pred_check
      _
    $region11: #{tpu_custom_call.1} parent=1 // pred_check_branch
      %31 = sbr.rel (0) target = $region13
    $region12: #{tpu_custom_call.1} parent=1 // pred_region
      %32 = dma.done [#allocation3], 128
    $region13: #{tpu_custom_call.1} parent=1 // pred_fallthru
      _
    // Predicated region
    $region14: #{tpu_custom_call.1} parent=1 // pred_check
      _
    $region15: #{tpu_custom_call.1} parent=1 // pred_check_branch
      %34 = sbr.rel (0) target = $region17
    $region16: #{tpu_custom_call.1} parent=1 // pred_region
      %35 = dma.done [#allocation6], 128
    $region17: #{tpu_custom_call.1} parent=1 // pred_fallthru
      _
    %v36 = vld [vmem:[#allocation2] sm:$0xff]
    %v37 = vld [vmem:[#allocation5] sm:$0xff]
    %vm38 = vcmask 261120
    %v39 = vsel %vm38, %v36, -inf
    %40 = vmax.xlane.f32.xlu0 %v39
    %v41 = vpop.xlane.xlu0 %40
    %v42 = vlaneseq
    %v43 = vand.u32 %v42, 127
    %vm44 = vcmp.eq.f32.partialorder %v36, %v41
    %v45 = vsel %vm44, %v43, 32
    %v46 = vsel %vm38, %v45, 2147483647
    %v47 = vand.u32 %v46, 65535
    %v48 = vshra.s32 %v46, 16
    %v49 = vcvt.s32.f32 %v47
    %v50 = vcvt.s32.f32 %v48
    %51 = vmin.xlane.f32.xlu0 %v50
    %v52 = vpop.xlane.xlu0 %51
    %vm53 = vcmp.eq.f32.partialorder %v50, %v52
    %v54 = vsel %vm53, %v49, inf
    %55 = vmin.xlane.f32.xlu0 %v54
    %v56 = vpop.xlane.xlu0 %55
    %v57 = vcvt.f32.s32 %v56
    %v58 = vcvt.f32.s32 %v52
    %v59 = vshll.u32 %v58, 16
    %v60 = vadd.s32 %v59, %v57
    %s61 = smul.u32 0, 8
    %v62 = vlaneseq
    %v63 = vshrl.u32 %v62, 7
    %v64 = vstv %s61
    %v65 = vadd.s32 %v64, %v63
    %vm66 = vcmp.lt.s32.totalorder %v65, 8
    %vm67 = vcmp.eq.s32.totalorder %v60, %v37
    %vm68 = vmand %vm67, %vm66
    %v69 = vsel %vm68, 1, 0
    %vm70 = vcmask 7168
    %v71 = vsel %vm70, %v69, 0
    %v72 = vand.u32 %v71, 65535
    %v73 = vshrl.u32 %v71, 16
    %v74 = vcvt.s32.f32 %v72
    %v75 = vcvt.s32.f32 %v73
    %76 = vadd.xlane.f32.xlu0 %v74
    %v77 = vpop.xlane.xlu0 %76
    %78 = vadd.xlane.f32.xlu0 %v75
    %v79 = vpop.xlane.xlu0 %78
    %v80 = vcvt.f32.s32 %v77
    %v81 = vcvt.f32.s32 %v79
    %v82 = vshll.u32 %v81, 16
    %v83 = vadd.s32 %v82, %v80
    %v84 = vrot.slane %v83, 4
    %v85 = vadd.s32 %v83, %v84
    %v86 = vrot.slane %v85, 2
    %v87 = vadd.s32 %v85, %v86
    %v88 = vrot.slane %v87, 1
    %v89 = vadd.s32 %v87, %v88
    %s90 = vtos %v89
    %s91 = scalar_lea.smem [#allocation7], 0
    %92 = sst [smem:[%s91]] %s90
    // Predicated region
    $region18: #{tpu_custom_call.1} parent=1 // pred_check
      _
    $region19: #{tpu_custom_call.1} parent=1 // pred_check_branch
      %94 = sbr.rel (0) target = $region21
    $region20: #{tpu_custom_call.1} parent=1 // pred_region
      %s96 = ssub.s32 16, 16
      %97 = vsyncadd [#allocation4], %s96
      %100 = dma.smem_to_hbm [#allocation7], 16, %s2, [#allocation4]
    $region21: #{tpu_custom_call.1} parent=1 // pred_fallthru
      _
    // Predicated region
    $region22: #{tpu_custom_call.1} parent=1 // pred_check
      _
    $region23: #{tpu_custom_call.1} parent=1 // pred_check_branch
      %102 = sbr.rel (0) target = $region25
    $region24: #{tpu_custom_call.1} parent=1 // pred_region
      %103 = dma.done [#allocation4], 16
    $region25: #{tpu_custom_call.1} parent=1 // pred_fallthru
      _
    %104 = sfence
    %105 = vsyncpa [#allocation3], 1
    %106 = vsyncpa [#allocation6], 1
    %107 = vsyncpa [#allocation4], 1

</llo_original>
